<compile_context>
chip_gen: v5e
topology: v5e:2x2
jax: 0.10.0
libtpu: 0.0.40
codegen_flags: <defaults>
</compile_context>

<pallas_src>
import functools

import jax
import jax.numpy as jnp
from jax.experimental import pallas as pl
from jax.experimental.pallas import tpu as pltpu


def _round_up(x, m):
    return (x + m - 1) // m * m


def _cdiv(a, b):
    return (a + b - 1) // b


# ----------------------------------------------------------------------------
# Quadrature weights (deterministic "parameter" init, mirrors GridQuadrature)
# ----------------------------------------------------------------------------
def naive_quadrature_weights(img_shape, normalize=False):
    nlat, nlon = img_shape
    jacobian = jnp.clip(jnp.sin(jnp.linspace(0.0, jnp.pi, nlat)), 0.0, None)
    dtheta = jnp.pi / nlat
    dlambda = 2.0 * jnp.pi / nlon
    dA = dlambda * dtheta
    quad_weight = dA * jacobian[:, None]                 # (nlat, 1)
    quad_weight = jnp.tile(quad_weight, (1, nlon))       # (nlat, nlon)
    # numerical precision: force integral of 1 over the sphere to be 4*pi
    quad_weight = quad_weight * (4.0 * jnp.pi) / jnp.sum(quad_weight)
    if normalize:
        quad_weight = quad_weight / (4.0 * jnp.pi)
    return quad_weight.astype(jnp.float32)


# ----------------------------------------------------------------------------
# Pallas kernel: tiled weighted covariance / variances, reduced over spatial k
# ----------------------------------------------------------------------------
def _geometric_acc_kernel(x_ref, y_ref, w_ref, acc_ref,
                          cov_ref, vx_ref, vy_ref,
                          *, eps, n_valid, mask_cols):
    k = pl.program_id(1)

    @pl.when(k == 0)
    def _init():
        cov_ref[...] = jnp.zeros_like(cov_ref)
        vx_ref[...] = jnp.zeros_like(vx_ref)
        vy_ref[...] = jnp.zeros_like(vy_ref)

    x = x_ref[...].astype(jnp.float32)   # (tm, tk)
    y = y_ref[...].astype(jnp.float32)   # (tm, tk)
    w = w_ref[...].astype(jnp.float32)   # (1,  tk) -> broadcasts over rows
    tm, tk = x.shape

    if mask_cols:
        # Ragged last spatial tile: OOB lanes hold unspecified VMEM contents
        # (possibly NaN), so zero x/y explicitly; the weight row is already
        # zero-padded on those lanes, hence every product below is 0.
        lane = jax.lax.broadcasted_iota(jnp.int32, (tm, tk), 1) + k * tk
        valid = lane < n_valid
        zero = jnp.zeros_like(x)
        x = jnp.where(valid, x, zero)
        y = jnp.where(valid, y, zero)

    xw = x * w
    yw = y * w

    # Lane-dense partial sums: 128-aligned reshape is layout-free, the axis=1
    # reduction is a chain of per-vreg adds (pure VALU, no XLU cross-lane op).
    def lane_partial(v):
        return v.reshape(tm, tk // 128, 128).sum(axis=1)

    cov_ref[...] += lane_partial(xw * y)
    vx_ref[...] += lane_partial(xw * x)
    vy_ref[...] += lane_partial(yw * y)

    @pl.when(k == pl.num_programs(1) - 1)
    def _finalize():
        cov = jnp.sum(cov_ref[...], axis=-1, keepdims=True)   # (tm, 1)
        vx = jnp.sum(vx_ref[...], axis=-1, keepdims=True)
        vy = jnp.sum(vy_ref[...], axis=-1, keepdims=True)
        acc_ref[...] = cov / (jnp.sqrt(vx * vy) + eps)


# ----------------------------------------------------------------------------
# Wrapper (glue: reshape, tile selection, pallas_call, channel/batch reduce)
# ----------------------------------------------------------------------------
def geometric_acc(
    x,
    y,
    quad_weight,
    channel_reduction="mean",
    batch_reduction="mean",
    eps=1e-8,
    row_tile=256,
    col_tile=None,
):
    B, C, H, W = x.shape
    assert y.shape == x.shape and quad_weight.shape == (H, W)

    R = B * C
    N = H * W
    itemsize = jnp.dtype(x.dtype).itemsize

    # Free (contiguous) reshapes — no extra HBM pass.
    x2 = x.reshape(R, N)
    y2 = y.reshape(R, N)
    w2 = quad_weight.reshape(1, N).astype(jnp.float32)

    # --- column (reduction) tile: lane-aligned; bf16 gets a 2x wider tile ---
    if col_tile is None:
        col_tile = 2048 if itemsize >= 4 else 4096
    tk = min(_round_up(col_tile, 128), _round_up(N, 128))

    # --- row tile: sublane-aligned; keep >= 2 row tiles whenever possible so
    #     the "parallel" axis can shard across v7x's two TensorCores. --------
    row_tile = max(8, _round_up(row_tile, 8))
    if R <= 8:
        tm = 8
    elif R <= 2 * row_tile:
        tm = _round_up(_cdiv(R, 2), 8)
    else:
        tm = row_tile

    grid = (_cdiv(R, tm), _cdiv(N, tk))
    r_out = grid[0] * tm            # padded output rows (tiny), sliced below
    n_lanes = grid[1] * tk
    mask_cols = (N % tk) != 0

    # Only the 1xN weight row is padded (zeros on OOB lanes) — x/y are not.
    if n_lanes != N:
        w2 = jnp.pad(w2, ((0, 0), (0, n_lanes - N)))

    cost = pl.CostEstimate(
        flops=int(8 * R * N),
        transcendentals=int(R),
        bytes_accessed=int(2 * R * N * itemsize + N * 4 + R * 4),
    )

    acc = pl.pallas_call(
        functools.partial(
            _geometric_acc_kernel, eps=eps, n_valid=N, mask_cols=mask_cols
        ),
        out_shape=jax.ShapeDtypeStruct((r_out, 1), jnp.float32),
        grid_spec=pltpu.PrefetchScalarGridSpec(
            num_scalar_prefetch=0,
            grid=grid,
            in_specs=[
                pl.BlockSpec((tm, tk), lambda i, k: (i, k)),
                pl.BlockSpec((tm, tk), lambda i, k: (i, k)),
                pl.BlockSpec((1, tk), lambda i, k: (0, k)),
            ],
            out_specs=pl.BlockSpec((tm, 1), lambda i, k: (i, 0)),
            scratch_shapes=[
                pltpu.VMEM((tm, 128), jnp.float32),
                pltpu.VMEM((tm, 128), jnp.float32),
                pltpu.VMEM((tm, 128), jnp.float32),
            ],
        ),
        compiler_params=pltpu.CompilerParams(
            dimension_semantics=("parallel", "arbitrary"),
        ),
        cost_estimate=cost,
    )(x2, y2, w2)

    acc = acc[:R, 0].reshape(B, C)
    if channel_reduction == "mean":
        acc = jnp.mean(acc, axis=1)
    elif channel_reduction == "sum":
        acc = jnp.sum(acc, axis=1)
    if batch_reduction == "mean":
        acc = jnp.mean(acc, axis=0)
    elif batch_reduction == "sum":
        acc = jnp.sum(acc, axis=0)
    return acc


# Pure-JAX reference (for a correctness sanity check)
def _geometric_acc_ref(x, y, w, eps=1e-8):
    xf, yf, wf = (a.astype(jnp.float32) for a in (x, y, w))
    quad = lambda u: jnp.sum(u * wf[None, None], axis=(-2, -1))
    cov_xy = quad(xf * yf)
    var_x = quad(xf * xf)
    var_y = quad(yf * yf)
    acc = cov_xy / (jnp.sqrt(var_x * var_y) + eps)
    return jnp.mean(jnp.mean(acc, axis=1), axis=0)


if __name__ == "__main__":
    key = jax.random.PRNGKey(0)

    # --- case 1: nicely-aligned toy shape, single k step ----------------------
    B, C, H, W = 2, 4, 16, 16
    kx, ky, key = jax.random.split(key, 3)
    x = jax.random.normal(kx, (B, C, H, W), dtype=jnp.float32)
    y = 0.7 * x + 0.3 * jax.random.normal(ky, (B, C, H, W), dtype=jnp.float32)
    qw = naive_quadrature_weights((H, W), normalize=False)

    out = jax.block_until_ready(geometric_acc(x, y, qw))
    ref = jax.block_until_ready(_geometric_acc_ref(x, y, qw))
    assert jnp.allclose(out, ref, rtol=1e-5, atol=1e-5), (out, ref)

    # --- case 1b: same inputs, forced small tiles -> multi-step k reduction ---
    out_small = jax.block_until_ready(
        geometric_acc(x, y, qw, row_tile=8, col_tile=128)
    )
    assert jnp.allclose(out_small, ref, rtol=1e-5, atol=1e-5), (out_small, ref)

    # --- case 2: ragged lanes (no input padding; in-kernel lane mask) ----------
    B2, C2, H2, W2 = 2, 3, 15, 16   # B*C=6, H*W=240 (ragged vs 128-lane tiles)
    kx2, ky2, key = jax.random.split(key, 3)
    x2 = jax.random.normal(kx2, (B2, C2, H2, W2), dtype=jnp.float32)
    y2 = 0.5 * x2 + 0.5 * jax.random.normal(ky2, (B2, C2, H2, W2), dtype=jnp.float32)
    qw2 = naive_quadrature_weights((H2, W2), normalize=False)

    out2 = jax.block_until_ready(geometric_acc(x2, y2, qw2))
    ref2 = jax.block_until_ready(_geometric_acc_ref(x2, y2, qw2))
    assert jnp.allclose(out2, ref2, rtol=1e-5, atol=1e-5), (out2, ref2)

    # --- case 3: ragged rows + ragged lanes, >= 2 row tiles ("parallel" axis) --
    B3, C3, H3, W3 = 3, 5, 17, 24   # B*C=15 -> two row tiles (8+7), H*W=408
    kx3, ky3, key = jax.random.split(key, 3)
    x3 = jax.random.normal(kx3, (B3, C3, H3, W3), dtype=jnp.float32)
    y3 = 0.6 * x3 + 0.4 * jax.random.normal(ky3, (B3, C3, H3, W3), dtype=jnp.float32)
    qw3 = naive_quadrature_weights((H3, W3), normalize=False)

    out3 = jax.block_until_ready(geometric_acc(x3, y3, qw3))
    ref3 = jax.block_until_ready(_geometric_acc_ref(x3, y3, qw3))
    assert jnp.allclose(out3, ref3, rtol=1e-5, atol=1e-5), (out3, ref3)

    # --- case 4: bf16 inputs (in-kernel f32 upcast, wider default col tile) ----
    xb = x3.astype(jnp.bfloat16)
    yb = y3.astype(jnp.bfloat16)
    outb = jax.block_until_ready(geometric_acc(xb, yb, qw3))
    refb = jax.block_until_ready(_geometric_acc_ref(xb, yb, qw3))
    assert jnp.allclose(outb, refb, rtol=2e-2, atol=2e-2), (outb, refb)

    print("KERNEL_OK")
</pallas_src>

<mosaic_0001>
module attributes {stable_mosaic.version = 11 : i64} {
  func.func @_geometric_acc_kernel(%arg0: i32, %arg1: i32, %arg2: memref<8x256xf32, #tpu.memory_space<vmem>>, %arg3: memref<8x256xf32, #tpu.memory_space<vmem>>, %arg4: memref<1x256xf32, #tpu.memory_space<vmem>>, %arg5: memref<8x1xf32, #tpu.memory_space<vmem>>, %arg6: memref<8x128xf32, #tpu.memory_space<vmem>>, %arg7: memref<8x128xf32, #tpu.memory_space<vmem>>, %arg8: memref<8x128xf32, #tpu.memory_space<vmem>>) attributes {dimension_semantics = [#tpu.dimension_semantics<parallel>, #tpu.dimension_semantics<arbitrary>], iteration_bounds = array<i64: 1, 1>, scalar_prefetch = 0 : i64, scratch_operands = 3 : i64, tpu.core_type = #tpu.core_type<tc>, window_params = [{transform_indices = @transform_0, window_bounds = array<i64: 8, 256>}, {transform_indices = @transform_1, window_bounds = array<i64: 8, 256>}, {transform_indices = @transform_2, window_bounds = array<i64: 1, 256>}, {transform_indices = @transform_3, window_bounds = array<i64: 8, 1>}]} {
    %c0_i32 = arith.constant 0 : i32
    %0 = arith.cmpi eq, %arg1, %c0_i32 : i32
    %1 = arith.extui %0 : i1 to i32
    %c0_i32_0 = arith.constant 0 : i32
    %2 = arith.cmpi ne, %1, %c0_i32_0 : i32
    scf.if %2 {
      %cst_22 = arith.constant 0.000000e+00 : f32
      %31 = vector.broadcast %cst_22 : f32 to vector<8x128xf32>
      %c0_23 = arith.constant 0 : index
      %c0_24 = arith.constant 0 : index
      %32 = vector.load %arg6[%c0_23, %c0_24] : memref<8x128xf32, #tpu.memory_space<vmem>>, vector<8x128xf32>
      tpu.vector_store %arg6[%c0_23, %c0_24], %31 {strides = array<i32>} : memref<8x128xf32, #tpu.memory_space<vmem>>, vector<8x128xf32>,
      %cst_25 = arith.constant 0.000000e+00 : f32
      %33 = vector.broadcast %cst_25 : f32 to vector<8x128xf32>
      %c0_26 = arith.constant 0 : index
      %c0_27 = arith.constant 0 : index
      %34 = vector.load %arg7[%c0_26, %c0_27] : memref<8x128xf32, #tpu.memory_space<vmem>>, vector<8x128xf32>
      tpu.vector_store %arg7[%c0_26, %c0_27], %33 {strides = array<i32>} : memref<8x128xf32, #tpu.memory_space<vmem>>, vector<8x128xf32>,
      %cst_28 = arith.constant 0.000000e+00 : f32
      %35 = vector.broadcast %cst_28 : f32 to vector<8x128xf32>
      %c0_29 = arith.constant 0 : index
      %c0_30 = arith.constant 0 : index
      %36 = vector.load %arg8[%c0_29, %c0_30] : memref<8x128xf32, #tpu.memory_space<vmem>>, vector<8x128xf32>
      tpu.vector_store %arg8[%c0_29, %c0_30], %35 {strides = array<i32>} : memref<8x128xf32, #tpu.memory_space<vmem>>, vector<8x128xf32>,
    } else {
    }
    %c0 = arith.constant 0 : index
    %c0_1 = arith.constant 0 : index
    %3 = vector.load %arg2[%c0, %c0_1] : memref<8x256xf32, #tpu.memory_space<vmem>>, vector<8x256xf32>
    %c0_2 = arith.constant 0 : index
    %c0_3 = arith.constant 0 : index
    %4 = vector.load %arg3[%c0_2, %c0_3] : memref<8x256xf32, #tpu.memory_space<vmem>>, vector<8x256xf32>
    %c0_4 = arith.constant 0 : index
    %c0_5 = arith.constant 0 : index
    %5 = vector.load %arg4[%c0_4, %c0_5] : memref<1x256xf32, #tpu.memory_space<vmem>>, vector<1x256xf32>
    %6 = vector.broadcast %5 : vector<1x256xf32> to vector<8x256xf32>
    %7 = arith.mulf %3, %6 : vector<8x256xf32>
    %8 = vector.broadcast %5 : vector<1x256xf32> to vector<8x256xf32>
    %9 = arith.mulf %4, %8 : vector<8x256xf32>
    %c0_6 = arith.constant 0 : index
    %c0_7 = arith.constant 0 : index
    %10 = vector.load %arg6[%c0_6, %c0_7] : memref<8x128xf32, #tpu.memory_space<vmem>>, vector<8x128xf32>
    %11 = arith.mulf %7, %4 : vector<8x256xf32>
    %12 = vector.shape_cast %11 : vector<8x256xf32> to vector<8x2x128xf32>
    %cst = arith.constant dense<0.000000e+00> : vector<8x128xf32>
    %13 = vector.multi_reduction <add>, %12, %cst [1] : vector<8x2x128xf32> to vector<8x128xf32>
    %14 = arith.addf %10, %13 : vector<8x128xf32>
    %c0_8 = arith.constant 0 : index
    %c0_9 = arith.constant 0 : index
    %15 = vector.load %arg6[%c0_8, %c0_9] : memref<8x128xf32, #tpu.memory_space<vmem>>, vector<8x128xf32>
    tpu.vector_store %arg6[%c0_8, %c0_9], %14 {strides = array<i32>} : memref<8x128xf32, #tpu.memory_space<vmem>>, vector<8x128xf32>,
    %c0_10 = arith.constant 0 : index
    %c0_11 = arith.constant 0 : index
    %16 = vector.load %arg7[%c0_10, %c0_11] : memref<8x128xf32, #tpu.memory_space<vmem>>, vector<8x128xf32>
    %17 = arith.mulf %7, %3 : vector<8x256xf32>
    %18 = vector.shape_cast %17 : vector<8x256xf32> to vector<8x2x128xf32>
    %cst_12 = arith.constant dense<0.000000e+00> : vector<8x128xf32>
    %19 = vector.multi_reduction <add>, %18, %cst_12 [1] : vector<8x2x128xf32> to vector<8x128xf32>
    %20 = arith.addf %16, %19 : vector<8x128xf32>
    %c0_13 = arith.constant 0 : index
    %c0_14 = arith.constant 0 : index
    %21 = vector.load %arg7[%c0_13, %c0_14] : memref<8x128xf32, #tpu.memory_space<vmem>>, vector<8x128xf32>
    tpu.vector_store %arg7[%c0_13, %c0_14], %20 {strides = array<i32>} : memref<8x128xf32, #tpu.memory_space<vmem>>, vector<8x128xf32>,
    %c0_15 = arith.constant 0 : index
    %c0_16 = arith.constant 0 : index
    %22 = vector.load %arg8[%c0_15, %c0_16] : memref<8x128xf32, #tpu.memory_space<vmem>>, vector<8x128xf32>
    %23 = arith.mulf %9, %4 : vector<8x256xf32>
    %24 = vector.shape_cast %23 : vector<8x256xf32> to vector<8x2x128xf32>
    %cst_17 = arith.constant dense<0.000000e+00> : vector<8x128xf32>
    %25 = vector.multi_reduction <add>, %24, %cst_17 [1] : vector<8x2x128xf32> to vector<8x128xf32>
    %26 = arith.addf %22, %25 : vector<8x128xf32>
    %c0_18 = arith.constant 0 : index
    %c0_19 = arith.constant 0 : index
    %27 = vector.load %arg8[%c0_18, %c0_19] : memref<8x128xf32, #tpu.memory_space<vmem>>, vector<8x128xf32>
    tpu.vector_store %arg8[%c0_18, %c0_19], %26 {strides = array<i32>} : memref<8x128xf32, #tpu.memory_space<vmem>>, vector<8x128xf32>,
    %c0_i32_20 = arith.constant 0 : i32
    %28 = arith.cmpi eq, %arg1, %c0_i32_20 : i32
    %29 = arith.extui %28 : i1 to i32
    %c0_i32_21 = arith.constant 0 : i32
    %30 = arith.cmpi ne, %29, %c0_i32_21 : i32
    scf.if %30 {
      %c0_22 = arith.constant 0 : index
      %c0_23 = arith.constant 0 : index
      %31 = vector.load %arg6[%c0_22, %c0_23] : memref<8x128xf32, #tpu.memory_space<vmem>>, vector<8x128xf32>
      %cst_24 = arith.constant dense<0.000000e+00> : vector<8xf32>
      %32 = vector.multi_reduction <add>, %31, %cst_24 [1] : vector<8x128xf32> to vector<8xf32>
      %33 = vector.shape_cast %32 : vector<8xf32> to vector<8x1xf32>
      %c0_25 = arith.constant 0 : index
      %c0_26 = arith.constant 0 : index
      %34 = vector.load %arg7[%c0_25, %c0_26] : memref<8x128xf32, #tpu.memory_space<vmem>>, vector<8x128xf32>
      %cst_27 = arith.constant dense<0.000000e+00> : vector<8xf32>
      %35 = vector.multi_reduction <add>, %34, %cst_27 [1] : vector<8x128xf32> to vector<8xf32>
      %36 = vector.shape_cast %35 : vector<8xf32> to vector<8x1xf32>
      %c0_28 = arith.constant 0 : index
      %c0_29 = arith.constant 0 : index
      %37 = vector.load %arg8[%c0_28, %c0_29] : memref<8x128xf32, #tpu.memory_space<vmem>>, vector<8x128xf32>
      %cst_30 = arith.constant dense<0.000000e+00> : vector<8xf32>
      %38 = vector.multi_reduction <add>, %37, %cst_30 [1] : vector<8x128xf32> to vector<8xf32>
      %39 = vector.shape_cast %38 : vector<8xf32> to vector<8x1xf32>
      %40 = arith.mulf %36, %39 : vector<8x1xf32>
      %41 = math.sqrt %40 : vector<8x1xf32>
      %cst_31 = arith.constant 9.99999993E-9 : f32
      %42 = vector.broadcast %cst_31 : f32 to vector<8x1xf32>
      %43 = arith.addf %41, %42 : vector<8x1xf32>
      %44 = arith.divf %33, %43 : vector<8x1xf32>
      %c0_32 = arith.constant 0 : index
      %c0_33 = arith.constant 0 : index
      %45 = vector.load %arg5[%c0_32, %c0_33] : memref<8x1xf32, #tpu.memory_space<vmem>>, vector<8x1xf32>
      tpu.vector_store %arg5[%c0_32, %c0_33], %44 {strides = array<i32>} : memref<8x1xf32, #tpu.memory_space<vmem>>, vector<8x1xf32>,
    } else {
    }
    return
  }
  func.func @transform_0(%arg0: i32, %arg1: i32) -> (i32, i32) {
    %c0_i32 = arith.constant 0 : i32
    return %arg0, %arg1 : i32, i32
  }
  func.func @transform_1(%arg0: i32, %arg1: i32) -> (i32, i32) {
    %c0_i32 = arith.constant 0 : i32
    return %arg0, %arg1 : i32, i32
  }
  func.func @transform_2(%arg0: i32, %arg1: i32) -> (i32, i32) {
    %c0_i32 = arith.constant 0 : i32
    %c0_i32_0 = arith.constant 0 : i32
    return %c0_i32, %arg1 : i32, i32
  }
  func.func @transform_3(%arg0: i32, %arg1: i32) -> (i32, i32) {
    %c0_i32 = arith.constant 0 : i32
    %c0_i32_0 = arith.constant 0 : i32
    return %arg0, %c0_i32 : i32, i32
  }
}

</mosaic_0001>

<llo_original>
// kernel: tpu_custom_call.1
$region0: #{tpu_custom_call.1}
  #allocation0 [shape = 'u32[]', space=smem, size = 0x4, offset = 0x4, fixed_abs, tag = 'smem constant byte address 0x4 - core index']
  #allocation1 [shape = 'u32[72,128]{1,0:T(1,128)}', space=vmem, size = 0x9000, scoped, tag = 'internal scratch']
  #allocation2 [shape = 'f32[8,128]{1,0:T(8,128)}', space=vmem, size = 0x1000, scoped, tag = 'scratch operand']
  #allocation3 [shape = 'f32[8,128]{1,0:T(8,128)}', space=vmem, size = 0x1000, scoped, tag = 'scratch operand']
  #allocation4 [shape = 'f32[8,128]{1,0:T(8,128)}', space=vmem, size = 0x1000, scoped, tag = 'scratch operand']
  %s0 = inlined_call_operand.hbm [shape: f32[8,256], index: 0, kind: input, shape index: {}]
  %s1 = inlined_call_operand.hbm [shape: f32[8,256], index: 1, kind: input, shape index: {}]
  %s2 = inlined_call_operand.hbm [shape: f32[1,256], index: 2, kind: input, shape index: {}]
  %s3 = inlined_call_operand.vmem [shape: f32[8,1], index: 3, kind: output, shape index: {}]
  %s4 = sld [smem:[#allocation0]]
  $region42: #{tpu_custom_call.1} parent=0
    _
  %s6 = ssub.s32 1, %s4
  %s7 = scalar_select 0, %s6, %s4
  $region1: #{tpu_custom_call.1} parent=0
    #allocation5 [shape = 'u8[8192]{0}', space=vmem, size = 0x2000, scoped, tag = 'input window, operand 0, single buffered']
    #allocation6 [shape = 's32[1]{0}', space=sflag, size = 0x4, scoped, tag = 'scoped memory for tpu_custom_call.1']
    #allocation7 [shape = 'u8[8192]{0}', space=vmem, size = 0x2000, scoped, tag = 'input window, operand 1, single buffered']
    #allocation8 [shape = 's32[1]{0}', space=sflag, size = 0x4, scoped, tag = 'scoped memory for tpu_custom_call.1']
    #allocation9 [shape = 'u8[1024]{0}', space=vmem, size = 0x400, scoped, tag = 'input window, operand 2, single buffered']
    %8 = vsyncpa [#allocation6], 0
    %9 = vsyncpa [#allocation8], 0
    // Predicated region
    $region2: #{tpu_custom_call.1} parent=1 // pred_check
      _
    $region3: #{tpu_custom_call.1} parent=1 // pred_check_branch
      %11 = sbr.rel (0) target = $region5
    $region4: #{tpu_custom_call.1} parent=1 // pred_region
      %13 = vsyncadd [#allocation6], 0
      %s15 = sshll.u32 %s0, 4
      %s16 = int_to_ptr.hbm [resolvable:$true] %s15
      %s17 = sshll.u32 [#allocation5], 4
      %s18 = int_to_ptr.vmem [resolvable:$true] %s17
      %20 = dma.hbm_to_vmem [thread:$0]  %s16, 256, %s18, [#allocation6]
    $region5: #{tpu_custom_call.1} parent=1 // pred_fallthru
      _
    // Predicated region
    $region6: #{tpu_custom_call.1} parent=1 // pred_check
      _
    $region7: #{tpu_custom_call.1} parent=1 // pred_check_branch
      %22 = sbr.rel (0) target = $region9
    $region8: #{tpu_custom_call.1} parent=1 // pred_region
      %24 = vsyncadd [#allocation8], 0
      %s26 = sshll.u32 %s1, 4
      %s27 = int_to_ptr.hbm [resolvable:$true] %s26
      %s28 = sshll.u32 [#allocation7], 4
      %s29 = int_to_ptr.vmem [resolvable:$true] %s28
      %31 = dma.hbm_to_vmem [thread:$0]  %s27, 256, %s29, [#allocation8]
    $region9: #{tpu_custom_call.1} parent=1 // pred_fallthru
      _
    // Predicated region
    $region10: #{tpu_custom_call.1} parent=1 // pred_check
      _
    $region11: #{tpu_custom_call.1} parent=1 // pred_check_branch
      %33 = sbr.rel (0) target = $region13
    $region12: #{tpu_custom_call.1} parent=1 // pred_region
      %35 = vsyncadd [#allocation8], 0
      %s37 = sshll.u32 %s2, 4
      %s38 = int_to_ptr.hbm [resolvable:$true] %s37
      %s39 = sshll.u32 [#allocation9], 4
      %s40 = int_to_ptr.vmem [resolvable:$true] %s39
      %42 = dma.hbm_to_vmem [thread:$0]  %s38, 32, %s40, [#allocation8]
    $region13: #{tpu_custom_call.1} parent=1 // pred_fallthru
      _
    // Predicated region
    $region14: #{tpu_custom_call.1} parent=1 // pred_check
      _
    $region15: #{tpu_custom_call.1} parent=1 // pred_check_branch
      %44 = sbr.rel (0) target = $region17
    $region16: #{tpu_custom_call.1} parent=1 // pred_region
      %46 = dma.done [#allocation6], 256
    $region17: #{tpu_custom_call.1} parent=1 // pred_fallthru
      _
    // Predicated region
    $region18: #{tpu_custom_call.1} parent=1 // pred_check
      _
    $region19: #{tpu_custom_call.1} parent=1 // pred_check_branch
      %48 = sbr.rel (0) target = $region21
    $region20: #{tpu_custom_call.1} parent=1 // pred_region
      %50 = dma.done [#allocation8], 256
    $region21: #{tpu_custom_call.1} parent=1 // pred_fallthru
      _
    // Predicated region
    $region22: #{tpu_custom_call.1} parent=1 // pred_check
      _
    $region23: #{tpu_custom_call.1} parent=1 // pred_check_branch
      %52 = sbr.rel (0) target = $region25
    $region24: #{tpu_custom_call.1} parent=1 // pred_region
      %54 = dma.done [#allocation8], 32
    $region25: #{tpu_custom_call.1} parent=1 // pred_fallthru
      _
    %p55 = scmp.eq.s32.totalorder 0, 0
    // Predicated region
    $region26: #{tpu_custom_call.1} parent=1 // pred_check
      %p56 = pneg %p55
    $region27: #{tpu_custom_call.1} parent=1 // pred_check_branch
      %58 = sbr.rel (%p56) target = $region29
    $region28: #{tpu_custom_call.1} parent=1 // pred_region
      %59 = vst [vmem:[#allocation2] sm:$0xff] 0.0
      %60 = vst [vmem:[#allocation3] sm:$0xff] 0.0
      %61 = vst [vmem:[#allocation4] sm:$0xff] 0.0
    $region29: #{tpu_custom_call.1} parent=1 // pred_fallthru
      _
    %v62 = vld [vmem:[#allocation5] sm:$0xff]
    %v63 = vld [vmem:[#allocation5 + $0x8] sm:$0xff]
    %v64 = vld [vmem:[#allocation7] sm:$0xff]
    %v65 = vld [vmem:[#allocation7 + $0x8] sm:$0xff]
    %v66 = vld [vmem:[#allocation9] sm:$0x3]
    %v68 = vperm.slane %v66, 0
    %v69 = vperm.slane %v66, 1
    %v72 = vmul.f32 %v62, %v68
    %v73 = vmul.f32 %v63, %v69
    %v74 = vmul.f32 %v64, %v68
    %v75 = vmul.f32 %v65, %v69
    %v76 = vld [vmem:[#allocation2] sm:$0xff]
    %v77 = vmul.f32 %v72, %v64
    %v78 = vmul.f32 %v73, %v65
    %v79 = vrot.slane %v77, 4
    %vm80 = vcmask 1047556
    %v81 = vsel %vm80, 0.0, %v79
    %v83 = vunpack.c.l.s4 1983009808
    %v84 = vunpack.c.0.s8 %v83
    %v85 = vperm.slane %v77, %v84
    %v87 = vunpack.c.l.s4 1983009808
    %v88 = vunpack.c.0.s8 %v87
    %v89 = vperm.slane %v81, %v88
    %v90 = vrot.slane %v78, 4
    %v91 = vsel %vm80, 0.0, %v90
    %v93 = vunpack.c.l.s4 1983009808
    %v94 = vunpack.c.0.s8 %v93
    %v95 = vperm.slane %v78, %v94
    %v97 = vunpack.c.l.s4 1983009808
    %v98 = vunpack.c.0.s8 %v97
    %v99 = vperm.slane %v91, %v98
    %v100 = vrot.slane %v95, 4
    %v101 = vsel %vm80, %v100, %v85
    %v102 = vrot.slane %v85, 4
    %v103 = vsel %vm80, %v95, %v102
    %v105 = vunpack.c.l.s4 1934713408
    %v106 = vunpack.c.0.s8 %v105
    %v107 = vperm.slane %v101, %v106
    %v109 = vunpack.c.l.s4 1934713408
    %v110 = vunpack.c.0.s8 %v109
    %v111 = vperm.slane %v103, %v110
    %v112 = vrot.slane %v99, 4
    %v113 = vsel %vm80, %v112, %v89
    %v114 = vrot.slane %v89, 4
    %v115 = vsel %vm80, %v99, %v114
    %v117 = vunpack.c.l.s4 1934713408
    %v118 = vunpack.c.0.s8 %v117
    %v119 = vperm.slane %v113, %v118
    %v121 = vunpack.c.l.s4 1934713408
    %v122 = vunpack.c.0.s8 %v121
    %v123 = vperm.slane %v115, %v122
    %v124 = vrot.slane %v107, 4
    %v125 = vsel %vm80, 0.0, %v124
    %v126 = vrot.slane %v111, 4
    %v127 = vsel %vm80, 0.0, %v126
    %v128 = vrot.slane %v119, 4
    %v129 = vsel %vm80, 0.0, %v128
    %v130 = vrot.slane %v123, 4
    %v131 = vsel %vm80, 0.0, %v130
    %vm132 = vcmask 1041408
    %v133 = vsel %vm132, %v107, 0.0
    %v134 = vrot.slane %v133, 4
    %v135 = vadd.f32 %v133, %v134
    %v136 = vrot.slane %v135, 2
    %v137 = vadd.f32 %v135, %v136
    %v138 = vrot.slane %v137, 1
    %v139 = vadd.f32 %v137, %v138
    %v140 = vsel %vm132, %v125, 0.0
    %v141 = vrot.slane %v140, 4
    %v142 = vadd.f32 %v140, %v141
    %v143 = vrot.slane %v142, 2
    %v144 = vadd.f32 %v142, %v143
    %v145 = vrot.slane %v144, 1
    %v146 = vadd.f32 %v144, %v145
    %v147 = vsel %vm132, %v111, 0.0
    %v148 = vrot.slane %v147, 4
    %v149 = vadd.f32 %v147, %v148
    %v150 = vrot.slane %v149, 2
    %v151 = vadd.f32 %v149, %v150
    %v152 = vrot.slane %v151, 1
    %v153 = vadd.f32 %v151, %v152
    %v154 = vsel %vm132, %v127, 0.0
    %v155 = vrot.slane %v154, 4
    %v156 = vadd.f32 %v154, %v155
    %v157 = vrot.slane %v156, 2
    %v158 = vadd.f32 %v156, %v157
    %v159 = vrot.slane %v158, 1
    %v160 = vadd.f32 %v158, %v159
    %v161 = vsel %vm132, %v119, 0.0
    %v162 = vrot.slane %v161, 4
    %v163 = vadd.f32 %v161, %v162
    %v164 = vrot.slane %v163, 2
    %v165 = vadd.f32 %v163, %v164
    %v166 = vrot.slane %v165, 1
    %v167 = vadd.f32 %v165, %v166
    %v168 = vsel %vm132, %v129, 0.0
    %v169 = vrot.slane %v168, 4
    %v170 = vadd.f32 %v168, %v169
    %v171 = vrot.slane %v170, 2
    %v172 = vadd.f32 %v170, %v171
    %v173 = vrot.slane %v172, 1
    %v174 = vadd.f32 %v172, %v173
    %v175 = vsel %vm132, %v123, 0.0
    %v176 = vrot.slane %v175, 4
    %v177 = vadd.f32 %v175, %v176
    %v178 = vrot.slane %v177, 2
    %v179 = vadd.f32 %v177, %v178
    %v180 = vrot.slane %v179, 1
    %v181 = vadd.f32 %v179, %v180
    %v182 = vsel %vm132, %v131, 0.0
    %v183 = vrot.slane %v182, 4
    %v184 = vadd.f32 %v182, %v183
    %v185 = vrot.slane %v184, 2
    %v186 = vadd.f32 %v184, %v185
    %v187 = vrot.slane %v186, 1
    %v188 = vadd.f32 %v186, %v187
    %vm197 = vcmask 1041409
    %v198 = vsel %vm197, %v146, %v139
    %vm199 = vcmask 1042434
    %v200 = vsel %vm199, %v153, %v198
    %vm201 = vcmask 1043459
    %v202 = vsel %vm201, %v160, %v200
    %vm203 = vcmask 1044484
    %v204 = vsel %vm203, %v167, %v202
    %vm205 = vcmask 1045509
    %v206 = vsel %vm205, %v174, %v204
    %vm207 = vcmask 1046534
    %v208 = vsel %vm207, %v181, %v206
    %vm209 = vcmask 1047559
    %v210 = vsel %vm209, %v188, %v208
    %v212 = vadd.f32 %v76, %v210
    %213 = vst [vmem:[#allocation2] sm:$0xff] %v212
    %v214 = vld [vmem:[#allocation3] sm:$0xff]
    %v215 = vmul.f32 %v72, %v62
    %v216 = vmul.f32 %v73, %v63
    %v217 = vrot.slane %v215, 4
    %v218 = vsel %vm80, 0.0, %v217
    %v220 = vunpack.c.l.s4 1983009808
    %v221 = vunpack.c.0.s8 %v220
    %v222 = vperm.slane %v215, %v221
    %v224 = vunpack.c.l.s4 1983009808
    %v225 = vunpack.c.0.s8 %v224
    %v226 = vperm.slane %v218, %v225
    %v227 = vrot.slane %v216, 4
    %v228 = vsel %vm80, 0.0, %v227
    %v230 = vunpack.c.l.s4 1983009808
    %v231 = vunpack.c.0.s8 %v230
    %v232 = vperm.slane %v216, %v231
    %v234 = vunpack.c.l.s4 1983009808
    %v235 = vunpack.c.0.s8 %v234
    %v236 = vperm.slane %v228, %v235
    %v237 = vrot.slane %v232, 4
    %v238 = vsel %vm80, %v237, %v222
    %v239 = vrot.slane %v222, 4
    %v240 = vsel %vm80, %v232, %v239
    %v242 = vunpack.c.l.s4 1934713408
    %v243 = vunpack.c.0.s8 %v242
    %v244 = vperm.slane %v238, %v243
    %v246 = vunpack.c.l.s4 1934713408
    %v247 = vunpack.c.0.s8 %v246
    %v248 = vperm.slane %v240, %v247
    %v249 = vrot.slane %v236, 4
    %v250 = vsel %vm80, %v249, %v226
    %v251 = vrot.slane %v226, 4
    %v252 = vsel %vm80, %v236, %v251
    %v254 = vunpack.c.l.s4 1934713408
    %v255 = vunpack.c.0.s8 %v254
    %v256 = vperm.slane %v250, %v255
    %v258 = vunpack.c.l.s4 1934713408
    %v259 = vunpack.c.0.s8 %v258
    %v260 = vperm.slane %v252, %v259
    %v261 = vrot.slane %v244, 4
    %v262 = vsel %vm80, 0.0, %v261
    %v263 = vrot.slane %v248, 4
    %v264 = vsel %vm80, 0.0, %v263
    %v265 = vrot.slane %v256, 4
    %v266 = vsel %vm80, 0.0, %v265
    %v267 = vrot.slane %v260, 4
    %v268 = vsel %vm80, 0.0, %v267
    %v269 = vsel %vm132, %v244, 0.0
    %v270 = vrot.slane %v269, 4
    %v271 = vadd.f32 %v269, %v270
    %v272 = vrot.slane %v271, 2
    %v273 = vadd.f32 %v271, %v272
    %v274 = vrot.slane %v273, 1
    %v275 = vadd.f32 %v273, %v274
    %v276 = vsel %vm132, %v262, 0.0
    %v277 = vrot.slane %v276, 4
    %v278 = vadd.f32 %v276, %v277
    %v279 = vrot.slane %v278, 2
    %v280 = vadd.f32 %v278, %v279
    %v281 = vrot.slane %v280, 1
    %v282 = vadd.f32 %v280, %v281
    %v283 = vsel %vm132, %v248, 0.0
    %v284 = vrot.slane %v283, 4
    %v285 = vadd.f32 %v283, %v284
    %v286 = vrot.slane %v285, 2
    %v287 = vadd.f32 %v285, %v286
    %v288 = vrot.slane %v287, 1
    %v289 = vadd.f32 %v287, %v288
    %v290 = vsel %vm132, %v264, 0.0
    %v291 = vrot.slane %v290, 4
    %v292 = vadd.f32 %v290, %v291
    %v293 = vrot.slane %v292, 2
    %v294 = vadd.f32 %v292, %v293
    %v295 = vrot.slane %v294, 1
    %v296 = vadd.f32 %v294, %v295
    %v297 = vsel %vm132, %v256, 0.0
    %v298 = vrot.slane %v297, 4
    %v299 = vadd.f32 %v297, %v298
    %v300 = vrot.slane %v299, 2
    %v301 = vadd.f32 %v299, %v300
    %v302 = vrot.slane %v301, 1
    %v303 = vadd.f32 %v301, %v302
    %v304 = vsel %vm132, %v266, 0.0
    %v305 = vrot.slane %v304, 4
    %v306 = vadd.f32 %v304, %v305
    %v307 = vrot.slane %v306, 2
    %v308 = vadd.f32 %v306, %v307
    %v309 = vrot.slane %v308, 1
    %v310 = vadd.f32 %v308, %v309
    %v311 = vsel %vm132, %v260, 0.0
    %v312 = vrot.slane %v311, 4
    %v313 = vadd.f32 %v311, %v312
    %v314 = vrot.slane %v313, 2
    %v315 = vadd.f32 %v313, %v314
    %v316 = vrot.slane %v315, 1
    %v317 = vadd.f32 %v315, %v316
    %v318 = vsel %vm132, %v268, 0.0
    %v319 = vrot.slane %v318, 4
    %v320 = vadd.f32 %v318, %v319
    %v321 = vrot.slane %v320, 2
    %v322 = vadd.f32 %v320, %v321
    %v323 = vrot.slane %v322, 1
    %v324 = vadd.f32 %v322, %v323
    %v333 = vsel %vm197, %v282, %v275
    %v334 = vsel %vm199, %v289, %v333
    %v335 = vsel %vm201, %v296, %v334
    %v336 = vsel %vm203, %v303, %v335
    %v337 = vsel %vm205, %v310, %v336
    %v338 = vsel %vm207, %v317, %v337
    %v339 = vsel %vm209, %v324, %v338
    %v341 = vadd.f32 %v214, %v339
    %342 = vst [vmem:[#allocation3] sm:$0xff] %v341
    %v343 = vld [vmem:[#allocation4] sm:$0xff]
    %v344 = vmul.f32 %v74, %v64
    %v345 = vmul.f32 %v75, %v65
    %v346 = vrot.slane %v344, 4
    %v347 = vsel %vm80, 0.0, %v346
    %v349 = vunpack.c.l.s4 1983009808
    %v350 = vunpack.c.0.s8 %v349
    %v351 = vperm.slane %v344, %v350
    %v353 = vunpack.c.l.s4 1983009808
    %v354 = vunpack.c.0.s8 %v353
    %v355 = vperm.slane %v347, %v354
    %v356 = vrot.slane %v345, 4
    %v357 = vsel %vm80, 0.0, %v356
    %v359 = vunpack.c.l.s4 1983009808
    %v360 = vunpack.c.0.s8 %v359
    %v361 = vperm.slane %v345, %v360
    %v363 = vunpack.c.l.s4 1983009808
    %v364 = vunpack.c.0.s8 %v363
    %v365 = vperm.slane %v357, %v364
    %v366 = vrot.slane %v361, 4
    %v367 = vsel %vm80, %v366, %v351
    %v368 = vrot.slane %v351, 4
    %v369 = vsel %vm80, %v361, %v368
    %v371 = vunpack.c.l.s4 1934713408
    %v372 = vunpack.c.0.s8 %v371
    %v373 = vperm.slane %v367, %v372
    %v375 = vunpack.c.l.s4 1934713408
    %v376 = vunpack.c.0.s8 %v375
    %v377 = vperm.slane %v369, %v376
    %v378 = vrot.slane %v365, 4
    %v379 = vsel %vm80, %v378, %v355
    %v380 = vrot.slane %v355, 4
    %v381 = vsel %vm80, %v365, %v380
    %v383 = vunpack.c.l.s4 1934713408
    %v384 = vunpack.c.0.s8 %v383
    %v385 = vperm.slane %v379, %v384
    %v387 = vunpack.c.l.s4 1934713408
    %v388 = vunpack.c.0.s8 %v387
    %v389 = vperm.slane %v381, %v388
    %v390 = vrot.slane %v373, 4
    %v391 = vsel %vm80, 0.0, %v390
    %v392 = vrot.slane %v377, 4
    %v393 = vsel %vm80, 0.0, %v392
    %v394 = vrot.slane %v385, 4
    %v395 = vsel %vm80, 0.0, %v394
    %v396 = vrot.slane %v389, 4
    %v397 = vsel %vm80, 0.0, %v396
    %v398 = vsel %vm132, %v373, 0.0
    %v399 = vrot.slane %v398, 4
    %v400 = vadd.f32 %v398, %v399
    %v401 = vrot.slane %v400, 2
    %v402 = vadd.f32 %v400, %v401
    %v403 = vrot.slane %v402, 1
    %v404 = vadd.f32 %v402, %v403
    %v405 = vsel %vm132, %v391, 0.0
    %v406 = vrot.slane %v405, 4
    %v407 = vadd.f32 %v405, %v406
    %v408 = vrot.slane %v407, 2
    %v409 = vadd.f32 %v407, %v408
    %v410 = vrot.slane %v409, 1
    %v411 = vadd.f32 %v409, %v410
    %v412 = vsel %vm132, %v377, 0.0
    %v413 = vrot.slane %v412, 4
    %v414 = vadd.f32 %v412, %v413
    %v415 = vrot.slane %v414, 2
    %v416 = vadd.f32 %v414, %v415
    %v417 = vrot.slane %v416, 1
    %v418 = vadd.f32 %v416, %v417
    %v419 = vsel %vm132, %v393, 0.0
    %v420 = vrot.slane %v419, 4
    %v421 = vadd.f32 %v419, %v420
    %v422 = vrot.slane %v421, 2
    %v423 = vadd.f32 %v421, %v422
    %v424 = vrot.slane %v423, 1
    %v425 = vadd.f32 %v423, %v424
    %v426 = vsel %vm132, %v385, 0.0
    %v427 = vrot.slane %v426, 4
    %v428 = vadd.f32 %v426, %v427
    %v429 = vrot.slane %v428, 2
    %v430 = vadd.f32 %v428, %v429
    %v431 = vrot.slane %v430, 1
    %v432 = vadd.f32 %v430, %v431
    %v433 = vsel %vm132, %v395, 0.0
    %v434 = vrot.slane %v433, 4
    %v435 = vadd.f32 %v433, %v434
    %v436 = vrot.slane %v435, 2
    %v437 = vadd.f32 %v435, %v436
    %v438 = vrot.slane %v437, 1
    %v439 = vadd.f32 %v437, %v438
    %v440 = vsel %vm132, %v389, 0.0
    %v441 = vrot.slane %v440, 4
    %v442 = vadd.f32 %v440, %v441
    %v443 = vrot.slane %v442, 2
    %v444 = vadd.f32 %v442, %v443
    %v445 = vrot.slane %v444, 1
    %v446 = vadd.f32 %v444, %v445
    %v447 = vsel %vm132, %v397, 0.0
    %v448 = vrot.slane %v447, 4
    %v449 = vadd.f32 %v447, %v448
    %v450 = vrot.slane %v449, 2
    %v451 = vadd.f32 %v449, %v450
    %v452 = vrot.slane %v451, 1
    %v453 = vadd.f32 %v451, %v452
    %v462 = vsel %vm197, %v411, %v404
    %v463 = vsel %vm199, %v418, %v462
    %v464 = vsel %vm201, %v425, %v463
    %v465 = vsel %vm203, %v432, %v464
    %v466 = vsel %vm205, %v439, %v465
    %v467 = vsel %vm207, %v446, %v466
    %v468 = vsel %vm209, %v453, %v467
    %v470 = vadd.f32 %v343, %v468
    %471 = vst [vmem:[#allocation4] sm:$0xff] %v470
    // Predicated region
    $region30: #{tpu_custom_call.1} parent=1 // pred_check
      %p472 = pneg %p55
    $region31: #{tpu_custom_call.1} parent=1 // pred_check_branch
      %474 = sbr.rel (%p472) target = $region33
    $region32: #{tpu_custom_call.1} parent=1 // pred_region
      %v475 = vld [vmem:[#allocation2] sm:$0xff]
      %476 = vadd.xlane.f32.xlu0 %v475
      %v477 = vpop.xlane.xlu0 %476
      %v478 = vld [vmem:[#allocation3] sm:$0xff]
      %479 = vadd.xlane.f32.xlu0 %v478
      %v480 = vpop.xlane.xlu0 %479
      %v481 = vld [vmem:[#allocation4] sm:$0xff]
      %482 = vadd.xlane.f32.xlu0 %v481
      %v483 = vpop.xlane.xlu0 %482
      %v484 = vmul.f32 %v480, %v483
      %v485 = vrsqrt.pop %v484
      %v486 = vmul.f32 %v485, %v484
      %v487 = vmul.f32 %v486, %v485
      %v488 = vmul.f32 0.5, %v487
      %v489 = vsub.f32 1.5, %v488
      %v490 = vmul.f32 %v485, %v489
      %v491 = vmul.f32 %v484, %v490
      %vm492 = vcmp.eq.f32.partialorder %v484, inf
      %v493 = vsel %vm492, %v484, %v491
      %vm494 = vcmp.eq.f32.partialorder %v484, 0.0
      %v495 = vand.u32 %v484, 2147483648
      %v496 = vsel %vm494, %v495, %v493
      %v497 = vadd.f32 %v496, 1e-08
      %v498 = vrcp.pop %v497
      %v499 = vmul.f32 %v497, %v498
      %v500 = vsub.f32 1.0, %v499
      %v501 = vmul.f32 %v498, %v500
      %v502 = vadd.f32 %v498, %v501
      %vm503 = vweird.f32 %v497
      %vm504 = vweird.f32 %v498
      %vm505 = vmor %vm503, %vm504
      %v506 = vsel %vm505, %v498, %v502
      %v507 = vand.u32 2147483647, %v497
      %vm508 = vcmp.eq.f32.partialorder %v507, 8.507059e+37
      %v509 = vand.u32 %v497, 2147483648
      %v510 = vor.u32 1.1754944e-38, %v509
      %v511 = vsel %vm508, %v510, %v506
      %v512 = vmul.f32 %v477, %v511
      %vm513 = vcmask 7168
      %514 = vst.msk [vmem:[%s3] sm:$0xff] %vm513, %v512
    $region33: #{tpu_custom_call.1} parent=1 // pred_fallthru
      _
    // Predicated region
    $region34: #{tpu_custom_call.1} parent=1 // pred_check
      _
    $region35: #{tpu_custom_call.1} parent=1 // pred_check_branch
      %516 = sbr.rel (0) target = $region37
    $region36: #{tpu_custom_call.1} parent=1 // pred_region
      _
    $region37: #{tpu_custom_call.1} parent=1 // pred_fallthru
      _
    // Predicated region
    $region38: #{tpu_custom_call.1} parent=1 // pred_check
      _
    $region39: #{tpu_custom_call.1} parent=1 // pred_check_branch
      %518 = sbr.rel (0) target = $region41
    $region40: #{tpu_custom_call.1} parent=1 // pred_region
      _
    $region41: #{tpu_custom_call.1} parent=1 // pred_fallthru
      _
    %519 = vsyncpa [#allocation6], 1
    %520 = vsyncpa [#allocation8], 1

</llo_original>
